<compile_context>
chip_gen: v5e
topology: v5e:2x2
jax: 0.10.0
libtpu: 0.0.40
codegen_flags: <defaults>
</compile_context>

<pallas_src>
import functools

import jax
import jax.numpy as jnp
from jax.experimental import pallas as pl
from jax.experimental.pallas import tpu as pltpu


def _round_up(x, m):
    return ((x + m - 1) // m) * m


def _focal_loss_kernel(logits_ref, labels_ref, sum_ref, *,
                       gamma, ignore_lb, hw, block_hw, half_blocks, mask_bounds):
    j = pl.program_id(2)  # block index within this spatial-split group (reduction axis)

    @pl.when(j == 0)
    def _():
        sum_ref[...] = jnp.zeros_like(sum_ref)

    x = logits_ref[0].astype(jnp.float32)        # (C, block_hw): class=sublane, space=lane
    labels = labels_ref[0].astype(jnp.int32)     # (1, block_hw)

    # Numerically stable log-softmax pieces over the class (sublane) axis.
    m = jnp.max(x, axis=0, keepdims=True)        # (1, block_hw)
    z = x - m
    s = jnp.sum(jnp.exp(z), axis=0, keepdims=True)

    # Target-class gather via a broadcast one-hot compare ((C,1) iota, no full-tile iota).
    # Note: label values >= C that are not ignore_lb contribute z_t = 0 (i.e.
    # factor*log(s)) instead of erroring like PyTorch's NLL gather would.
    class_ids = jax.lax.broadcasted_iota(jnp.int32, (x.shape[0], 1), 0)  # (C, 1)
    onehot = class_ids == labels                                          # (C, block_hw)
    z_t = jnp.sum(jnp.where(onehot, z, 0.0), axis=0, keepdims=True)       # (1, block_hw)

    log_p_t = z_t - jnp.log(s)                   # log-softmax of the target class
    p_t = jnp.exp(log_p_t)                       # softmax prob of the target class (EUP)

    # Focal factor (1 - p_t)^gamma; integer gamma => plain VPU multiplies (no pow).
    one_minus = 1.0 - p_t
    ig = int(gamma)
    if float(gamma) == float(ig) and 0 <= ig <= 16:
        factor = jnp.ones_like(one_minus) if ig == 0 else one_minus
        for _ in range(max(ig - 1, 0)):
            factor = factor * one_minus
    else:
        factor = jnp.power(one_minus, jnp.float32(gamma))

    # Validity mask: ignore_index, plus (when needed) out-of-range lanes from
    # remainder blocks and the clamped duplicate block of the spatial split.
    valid = labels != ignore_lb
    if mask_bounds:
        c = pl.program_id(0)
        blk = c * half_blocks + j
        lane = jax.lax.broadcasted_iota(jnp.int32, labels.shape, 1)
        valid = valid & ((blk * block_hw + lane) < hw)

    per_elem = jnp.where(valid, -(factor * log_p_t), 0.0)  # (1, block_hw)

    # Lane-wise partial accumulation: no cross-lane reduce inside the kernel.
    sum_ref[...] += per_elem.reshape(sum_ref.shape)


def softmax_focal_loss(logits, labels, gamma, ignore_lb=255,
                       block_hw=None, hw_splits=None):
    """logits: (N, C, H, W) float (f32 or bf16); labels: (N, H, W) int (any int dtype).

    Returns the scalar mean focal loss (NaN if every label is ignored,
    matching PyTorch NLLLoss(reduction='mean', ignore_index=...)).
    """
    N, C, H, W = logits.shape
    HW = H * W

    # Native NCHW layout: pure reshapes, no HBM transpose, no dtype pre-casts.
    x3d = logits.reshape(N, C, HW)
    lab3d = labels.reshape(N, 1, HW)

    elt = jnp.dtype(logits.dtype).itemsize
    if block_hw is None:
        # ~4 MiB of logits per block (128-aligned). Double-buffered inputs plus
        # the in-body f32 temporaries keep the working set ~24-28 MiB, under the
        # explicit 48 MiB limit below and safe on v7x's 64 MiB VMEM, while large
        # enough to amortize per-grid-step overhead on v5e/v6e.
        target_bytes = 4 * 1024 * 1024
        block_hw = target_bytes // (elt * max(C, 1))
    block_hw = max(128, (block_hw // 128) * 128)      # lane-aligned
    block_hw = min(block_hw, _round_up(HW, 128))      # don't exceed the array

    n_blocks = pl.cdiv(HW, block_hw)
    if hw_splits is None:
        # v7x has 2 TensorCores: if the batch axis alone can't feed both
        # (N odd / N == 1), split the spatial block range into 2 parallel groups.
        hw_splits = 2 if (N % 2 == 1 and n_blocks >= 2) else 1
    hw_splits = max(1, min(int(hw_splits), n_blocks))
    half_blocks = pl.cdiv(n_blocks, hw_splits)

    # Lane-bound masking is only needed for remainder blocks / duplicated
    # clamp blocks of an uneven split.
    mask_bounds = (HW % block_hw != 0) or (n_blocks % hw_splits != 0)

    def spatial_idx(c, n, j):
        # Clamp so the DMA stays in bounds; the kernel masks the duplicate block.
        return (n, 0, jnp.minimum(c * half_blocks + j, n_blocks - 1))

    kernel = functools.partial(
        _focal_loss_kernel, gamma=float(gamma), ignore_lb=int(ignore_lb),
        hw=HW, block_hw=block_hw, half_blocks=half_blocks, mask_bounds=mask_bounds)

    # NOTE: class-axis padding to a multiple of 8 was considered but skipped —
    # it would require a full extra HBM copy of the logits, which costs more
    # than the sublane padding it removes on this memory-bound kernel.
    sum_part = pl.pallas_call(
        kernel,
        out_shape=jax.ShapeDtypeStruct((N, hw_splits, block_hw), jnp.float32),
        grid_spec=pltpu.PrefetchScalarGridSpec(
            num_scalar_prefetch=0,
            grid=(hw_splits, N, half_blocks),
            in_specs=[
                pl.BlockSpec((1, C, block_hw), spatial_idx),
                pl.BlockSpec((1, 1, block_hw), spatial_idx),
            ],
            out_specs=pl.BlockSpec((1, 1, block_hw), lambda c, n, j: (n, c, 0)),
        ),
        compiler_params=pltpu.CompilerParams(
            # Split/batch axes parallel (megacore), block axis is the reduction.
            dimension_semantics=("parallel", "parallel", "arbitrary"),
            # Raise v5e's 16 MiB scoped default; stays under v7x's 64 MiB VMEM.
            vmem_limit_bytes=48 * 1024 * 1024,
        ),
    )(x3d, lab3d)

    loss_sum = jnp.sum(sum_part)
    # Valid-element count computed outside the kernel: one cheap fused reduction
    # over the (small) label array; removes the second in-kernel accumulator.
    valid_cnt = jnp.sum((labels != ignore_lb).astype(jnp.float32))
    # NLLLoss(reduction='mean', ignore_index): divide by #non-ignored elements.
    # (NaN if every label is ignored — matches PyTorch.)
    return (loss_sum / valid_cnt).astype(jnp.float32)


def _reference_loss(logits, labels, gamma, ignore_lb=255):
    """Pure-JAX reference mirroring the PyTorch module."""
    logits = logits.astype(jnp.float32)
    labels_i = labels.astype(jnp.int32)
    scores = jax.nn.softmax(logits, axis=1)
    factor = jnp.power(1.0 - scores, gamma)
    log_score = jax.nn.log_softmax(logits, axis=1)
    weighted = factor * log_score                          # (N, C, H, W)
    picked = jnp.take_along_axis(
        weighted, jnp.clip(labels_i, 0, logits.shape[1] - 1)[:, None], axis=1
    )[:, 0]                                                # (N, H, W)
    valid = labels_i != ignore_lb
    loss_sum = jnp.sum(jnp.where(valid, -picked, 0.0))
    return loss_sum / jnp.sum(valid.astype(jnp.float32))


if __name__ == "__main__":
    key = jax.random.PRNGKey(0)
    ignore_lb = 255
    k1, k2, k3, k4 = jax.random.split(key, 4)

    # Test 1: typical NCHW f32 logits, int32 labels, integer gamma (VPU path).
    N, C, H, W = 2, 4, 16, 16
    gamma = 2.0
    logits = jax.random.normal(k1, (N, C, H, W), dtype=jnp.float32)
    labels = jax.random.randint(k2, (N, H, W), 0, C, dtype=jnp.int32)
    labels = labels.at[0, 0, :4].set(ignore_lb)
    labels = labels.at[1, 5, 7].set(ignore_lb)

    loss = jax.block_until_ready(softmax_focal_loss(logits, labels, gamma, ignore_lb))
    ref = jax.block_until_ready(_reference_loss(logits, labels, gamma, ignore_lb))
    assert jnp.allclose(loss, ref, rtol=1e-5, atol=1e-5), (loss, ref)

    # Test 2: N=1 (exercises the 2-way spatial split for v7x), odd class count,
    # uint8 labels (narrow label traffic), ragged HW (remainder-block masking),
    # and non-integer gamma (pow path).
    N2, C2, H2, W2 = 1, 19, 9, 31
    gamma2 = 1.5
    logits2 = jax.random.normal(k3, (N2, C2, H2, W2), dtype=jnp.float32)
    labels2 = jax.random.randint(k4, (N2, H2, W2), 0, C2, dtype=jnp.int32)
    labels2 = labels2.at[0, 2, :5].set(ignore_lb)
    labels2 = labels2.astype(jnp.uint8)

    loss2 = jax.block_until_ready(
        softmax_focal_loss(logits2, labels2, gamma2, ignore_lb, block_hw=128))
    ref2 = jax.block_until_ready(_reference_loss(logits2, labels2, gamma2, ignore_lb))
    assert jnp.allclose(loss2, ref2, rtol=1e-5, atol=1e-5), (loss2, ref2)

    print("KERNEL_OK")
</pallas_src>

<mosaic_0001>
module attributes {stable_mosaic.version = 11 : i64} {
  func.func @_focal_loss_kernel(%arg0: i32, %arg1: i32, %arg2: i32, %arg3: memref<1x4x256xf32, #tpu.memory_space<vmem>>, %arg4: memref<1x1x256xi32, #tpu.memory_space<vmem>>, %arg5: memref<1x1x256xf32, #tpu.memory_space<vmem>>) attributes {dimension_semantics = [#tpu.dimension_semantics<parallel>, #tpu.dimension_semantics<parallel>, #tpu.dimension_semantics<arbitrary>], iteration_bounds = array<i64: 1, 2, 1>, scalar_prefetch = 0 : i64, scratch_operands = 0 : i64, tpu.core_type = #tpu.core_type<tc>, window_params = [{transform_indices = @transform_0, window_bounds = array<i64: 1, 4, 256>}, {transform_indices = @transform_1, window_bounds = array<i64: 1, 1, 256>}, {transform_indices = @transform_2, window_bounds = array<i64: 1, 1, 256>}]} {
    %c0_i32 = arith.constant 0 : i32
    %0 = arith.cmpi eq, %arg2, %c0_i32 : i32
    %1 = arith.extui %0 : i1 to i32
    %c0_i32_0 = arith.constant 0 : i32
    %2 = arith.cmpi ne, %1, %c0_i32_0 : i32
    scf.if %2 {
      %cst_18 = arith.constant 0.000000e+00 : f32
      %39 = vector.broadcast %cst_18 : f32 to vector<1x1x256xf32>
      %c0_19 = arith.constant 0 : index
      %c0_20 = arith.constant 0 : index
      %c0_21 = arith.constant 0 : index
      %40 = vector.load %arg5[%c0_19, %c0_20, %c0_21] : memref<1x1x256xf32, #tpu.memory_space<vmem>>, vector<1x1x256xf32>
      tpu.vector_store %arg5[%c0_19, %c0_20, %c0_21], %39 {strides = array<i32>} : memref<1x1x256xf32, #tpu.memory_space<vmem>>, vector<1x1x256xf32>,
    } else {
    }
    %c0 = arith.constant 0 : index
    %c0_1 = arith.constant 0 : index
    %c0_2 = arith.constant 0 : index
    %3 = vector.load %arg3[%c0, %c0_1, %c0_2] : memref<1x4x256xf32, #tpu.memory_space<vmem>>, vector<1x4x256xf32>
    %4 = vector.shape_cast %3 : vector<1x4x256xf32> to vector<4x256xf32>
    %c0_3 = arith.constant 0 : index
    %c0_4 = arith.constant 0 : index
    %c0_5 = arith.constant 0 : index
    %5 = vector.load %arg4[%c0_3, %c0_4, %c0_5] : memref<1x1x256xi32, #tpu.memory_space<vmem>>, vector<1x1x256xi32>
    %6 = vector.shape_cast %5 : vector<1x1x256xi32> to vector<1x256xi32>
    %cst = arith.constant dense<0xFF800000> : vector<256xf32>
    %7 = vector.multi_reduction <maximumf>, %4, %cst [0] : vector<4x256xf32> to vector<256xf32>
    %8 = vector.shape_cast %7 : vector<256xf32> to vector<1x256xf32>
    %9 = vector.broadcast %8 : vector<1x256xf32> to vector<4x256xf32>
    %10 = arith.subf %4, %9 : vector<4x256xf32>
    %11 = math.exp %10 : vector<4x256xf32>
    %cst_6 = arith.constant dense<0.000000e+00> : vector<256xf32>
    %12 = vector.multi_reduction <add>, %11, %cst_6 [0] : vector<4x256xf32> to vector<256xf32>
    %13 = vector.shape_cast %12 : vector<256xf32> to vector<1x256xf32>
    %14 = tpu.iota {dimensions = array<i32: 0>} : vector<4x1xi32>
    %15 = vector.broadcast %14 : vector<4x1xi32> to vector<4x256xi32>
    %16 = vector.broadcast %6 : vector<1x256xi32> to vector<4x256xi32>
    %17 = arith.cmpi eq, %15, %16 : vector<4x256xi32>
    %cst_7 = arith.constant 0.000000e+00 : f32
    %18 = vector.broadcast %cst_7 : f32 to vector<4x256xf32>
    %19 = arith.select %17, %10, %18 : vector<4x256xi1>, vector<4x256xf32>
    %cst_8 = arith.constant dense<0.000000e+00> : vector<256xf32>
    %20 = vector.multi_reduction <add>, %19, %cst_8 [0] : vector<4x256xf32> to vector<256xf32>
    %21 = vector.shape_cast %20 : vector<256xf32> to vector<1x256xf32>
    %22 = math.log %13 : vector<1x256xf32>
    %23 = arith.subf %21, %22 : vector<1x256xf32>
    %24 = math.exp %23 : vector<1x256xf32>
    %cst_9 = arith.constant 1.000000e+00 : f32
    %25 = vector.broadcast %cst_9 : f32 to vector<1x256xf32>
    %26 = arith.subf %25, %24 : vector<1x256xf32>
    %27 = arith.mulf %26, %26 : vector<1x256xf32>
    %c255_i32 = arith.constant 255 : i32
    %28 = vector.broadcast %c255_i32 : i32 to vector<1x256xi32>
    %29 = arith.cmpi ne, %6, %28 : vector<1x256xi32>
    %30 = arith.mulf %27, %23 : vector<1x256xf32>
    %cst_10 = arith.constant 0.000000e+00 : f32
    %31 = vector.broadcast %cst_10 : f32 to vector<1x256xf32>
    %32 = arith.subf %31, %30 : vector<1x256xf32>
    %cst_11 = arith.constant 0.000000e+00 : f32
    %33 = vector.broadcast %cst_11 : f32 to vector<1x256xf32>
    %34 = arith.select %29, %32, %33 : vector<1x256xi1>, vector<1x256xf32>
    %c0_12 = arith.constant 0 : index
    %c0_13 = arith.constant 0 : index
    %c0_14 = arith.constant 0 : index
    %35 = vector.load %arg5[%c0_12, %c0_13, %c0_14] : memref<1x1x256xf32, #tpu.memory_space<vmem>>, vector<1x1x256xf32>
    %36 = vector.shape_cast %34 : vector<1x256xf32> to vector<1x1x256xf32>
    %37 = arith.addf %35, %36 : vector<1x1x256xf32>
    %c0_15 = arith.constant 0 : index
    %c0_16 = arith.constant 0 : index
    %c0_17 = arith.constant 0 : index
    %38 = vector.load %arg5[%c0_15, %c0_16, %c0_17] : memref<1x1x256xf32, #tpu.memory_space<vmem>>, vector<1x1x256xf32>
    tpu.vector_store %arg5[%c0_15, %c0_16, %c0_17], %37 {strides = array<i32>} : memref<1x1x256xf32, #tpu.memory_space<vmem>>, vector<1x1x256xf32>,
    return
  }
  func.func @transform_0(%arg0: i32, %arg1: i32, %arg2: i32) -> (i32, i32, i32) {
    %c1_i32 = arith.constant 1 : i32
    %0 = arith.muli %arg0, %c1_i32 : i32
    %1 = arith.addi %0, %arg2 : i32
    %c0_i32 = arith.constant 0 : i32
    %2 = arith.minsi %1, %c0_i32 : i32
    %c0_i32_0 = arith.constant 0 : i32
    %c0_i32_1 = arith.constant 0 : i32
    return %arg1, %c0_i32_0, %2 : i32, i32, i32
  }
  func.func @transform_1(%arg0: i32, %arg1: i32, %arg2: i32) -> (i32, i32, i32) {
    %c1_i32 = arith.constant 1 : i32
    %0 = arith.muli %arg0, %c1_i32 : i32
    %1 = arith.addi %0, %arg2 : i32
    %c0_i32 = arith.constant 0 : i32
    %2 = arith.minsi %1, %c0_i32 : i32
    %c0_i32_0 = arith.constant 0 : i32
    %c0_i32_1 = arith.constant 0 : i32
    return %arg1, %c0_i32_0, %2 : i32, i32, i32
  }
  func.func @transform_2(%arg0: i32, %arg1: i32, %arg2: i32) -> (i32, i32, i32) {
    %c0_i32 = arith.constant 0 : i32
    %c0_i32_0 = arith.constant 0 : i32
    return %arg1, %arg0, %c0_i32 : i32, i32, i32
  }
}

</mosaic_0001>

<llo_original>
// kernel: tpu_custom_call.1
$region0: #{tpu_custom_call.1}
  #allocation0 [shape = 'u32[]', space=smem, size = 0x4, offset = 0x4, fixed_abs, tag = 'smem constant byte address 0x4 - core index']
  #allocation1 [shape = 'u32[72,128]{1,0:T(1,128)}', space=vmem, size = 0x9000, scoped, tag = 'internal scratch']
  %s0 = inlined_call_operand.hbm [shape: f32[2,4,256], index: 0, kind: input, shape index: {}]
  %s1 = inlined_call_operand.hbm [shape: s32[2,1,256], index: 1, kind: input, shape index: {}]
  %s2 = inlined_call_operand.hbm [shape: f32[2,1,256], index: 2, kind: output, shape index: {}]
  %s3 = sld [smem:[#allocation0]]
  $region53: #{tpu_custom_call.1} parent=0
    _
  %s5 = ssub.s32 1, %s3
  %s6 = scalar_select 0, %s5, %s3
  $region1: #{tpu_custom_call.1} parent=0
    #allocation2 [shape = 'u8[8192]{0}', space=vmem, size = 0x2000, scoped, tag = 'input window, operand 0']
    #allocation3 [shape = 's32[2]{0}', space=sflag, size = 0x8, scoped, tag = 'scoped memory for tpu_custom_call.1']
    #allocation4 [shape = 's32[2]{0}', space=sflag, size = 0x8, scoped, tag = 'scoped memory for tpu_custom_call.1']
    #allocation5 [shape = 'u8[2048]{0}', space=vmem, size = 0x800, scoped, tag = 'input window, operand 1']
    #allocation6 [shape = 's32[2]{0}', space=sflag, size = 0x8, scoped, tag = 'scoped memory for tpu_custom_call.1']
    #allocation7 [shape = 'u8[2048]{0}', space=vmem, size = 0x800, scoped, tag = 'output window, operand 0']
    %7 = vsyncpa [#allocation3], 0
    %s8 = scalar_lea.sflag [#allocation3], 1
    %9 = vsyncpa %s8, 0
    %10 = vsyncpa [#allocation6], 0
    %s11 = scalar_lea.sflag [#allocation6], 1
    %12 = vsyncpa %s11, 0
    %13 = vsyncpa [#allocation4], 0
    %s14 = scalar_lea.sflag [#allocation4], 1
    %15 = vsyncpa %s14, 0
    loop: start=0, step=1, limit=4
    $region2: #{tpu_custom_call.1} parent=1 // loop_pre_header
      _
    $region3: #{tpu_custom_call.1} parent=1 // loop_header
      %s17 = sphi 0, %s21
      %p18 = scmp.ge.s32.totalorder %s17, 4
      %s24 = sphi 0, %s43
      %s25 = sphi 0, %s39
      %s26 = sphi 0, %s35
      %s27 = sphi 0, %s24
      %s28 = sphi 0, %s25
      %s29 = sphi 0, %s26
      %s30 = sphi 0, %s27
      %s31 = sphi 0, %s28
      %s32 = sphi 0, %s29
      %s54 = sphi 0, %s56
      %s57 = sphi 0, %s54
      %s58 = sphi 0, %s57
      %s74 = sphi 0, %s58
      %s88 = sphi 0, %s90
      %s91 = sphi 0, %s88
      %s92 = sphi 0, %s91
      %s108 = sphi 0, %s92
      %s116 = sphi 0, %s118
      %s119 = sphi 0, %s116
      %s120 = sphi 0, %s119
      %s136 = sphi 0, %s120
    $region4: #{tpu_custom_call.1} parent=1 // loop_header_branch
      %20 = sbr.rel (%p18) target = $region8
    $region5: #{tpu_custom_call.1} parent=1 // loop_body
      %s22 = ssub.s32 %s17, 1
      %s23 = ssub.s32 %s17, 2
      %s33 = sadd.s32 1, %s26
      %p34 = scmp.ge.s32.totalorder %s33, 1
      %s35 = scalar_select %p34, 0, %s33
      %s36 = sadd.s32 1, %s25
      %s37 = scalar_select %p34, %s36, %s25
      %p38 = scmp.ge.s32.totalorder %s37, 2
      %s39 = scalar_select %p38, 0, %s37
      %s40 = sadd.s32 1, %s24
      %s41 = scalar_select %p38, %s40, %s24
      %p42 = scmp.ge.s32.totalorder %s41, 1
      %s43 = scalar_select %p42, 0, %s41
      %s44 = sadd.s32 %s24, %s26
      %p45 = scmp.lt.s32.totalorder %s44, 0
      %s46 = scalar_select %p45, %s44, 0
      %s47 = sadd.s32 %s43, %s35
      %p48 = scmp.lt.s32.totalorder %s47, 0
      %s49 = scalar_select %p48, %s47, 0
      %s50 = ssub.s32 %s25, %s39
      %s51 = ssub.s32 %s46, %s49
      %s52 = sor.u32 %s50, %s51
      %p53 = scmp.eq.s32.totalorder %s52, 0
      %s55 = sadd.s32 %s54, 1
      %s56 = scalar_select %p53, %s54, %s55
      %p59 = pneg %p53
      %p60 = scmp.eq.s32.totalorder %s17, 1
      %p61 = por %p59, %p60
      %p62 = scmp.ne.s32.totalorder %s54, %s57
      %p63 = scmp.eq.s32.totalorder %s17, 0
      %p64 = por %p62, %p63
      %p65 = scmp.ne.s32.totalorder %s54, %s57
      %p66 = scmp.eq.s32.totalorder %s22, 1
      %p67 = por %p65, %p66
      %p68 = scmp.ne.s32.totalorder %s57, %s58
      %p69 = scmp.eq.s32.totalorder %s22, 0
      %p70 = por %p68, %p69
      %p71 = scmp.ne.s32.totalorder %s57, %s58
      %p72 = scmp.eq.s32.totalorder %s23, 1
      %p73 = por %p71, %p72
      %p75 = scmp.ne.s32.totalorder %s58, %s74
      %p76 = scmp.eq.s32.totalorder %s23, 0
      %p77 = por %p75, %p76
      %s78 = sadd.s32 %s24, %s26
      %p79 = scmp.lt.s32.totalorder %s78, 0
      %s80 = scalar_select %p79, %s78, 0
      %s81 = sadd.s32 %s43, %s35
      %p82 = scmp.lt.s32.totalorder %s81, 0
      %s83 = scalar_select %p82, %s81, 0
      %s84 = ssub.s32 %s25, %s39
      %s85 = ssub.s32 %s80, %s83
      %s86 = sor.u32 %s84, %s85
      %p87 = scmp.eq.s32.totalorder %s86, 0
      %s89 = sadd.s32 %s88, 1
      %s90 = scalar_select %p87, %s88, %s89
      %p93 = pneg %p87
      %p94 = scmp.eq.s32.totalorder %s17, 1
      %p95 = por %p93, %p94
      %p96 = scmp.ne.s32.totalorder %s88, %s91
      %p97 = scmp.eq.s32.totalorder %s17, 0
      %p98 = por %p96, %p97
      %p99 = scmp.ne.s32.totalorder %s88, %s91
      %p100 = scmp.eq.s32.totalorder %s22, 1
      %p101 = por %p99, %p100
      %p102 = scmp.ne.s32.totalorder %s91, %s92
      %p103 = scmp.eq.s32.totalorder %s22, 0
      %p104 = por %p102, %p103
      %p105 = scmp.ne.s32.totalorder %s91, %s92
      %p106 = scmp.eq.s32.totalorder %s23, 1
      %p107 = por %p105, %p106
      %p109 = scmp.ne.s32.totalorder %s92, %s108
      %p110 = scmp.eq.s32.totalorder %s23, 0
      %p111 = por %p109, %p110
      %s112 = ssub.s32 %s25, %s39
      %s113 = ssub.s32 %s24, %s43
      %s114 = sor.u32 %s112, %s113
      %p115 = scmp.eq.s32.totalorder %s114, 0
      %s117 = sadd.s32 %s116, 1
      %s118 = scalar_select %p115, %s116, %s117
      %p121 = pneg %p115
      %p122 = scmp.eq.s32.totalorder %s17, 1
      %p123 = por %p121, %p122
      %p124 = scmp.ne.s32.totalorder %s116, %s119
      %p125 = scmp.eq.s32.totalorder %s17, 0
      %p126 = por %p124, %p125
      %p127 = scmp.ne.s32.totalorder %s116, %s119
      %p128 = scmp.eq.s32.totalorder %s22, 1
      %p129 = por %p127, %p128
      %p130 = scmp.ne.s32.totalorder %s119, %s120
      %p131 = scmp.eq.s32.totalorder %s22, 0
      %p132 = por %p130, %p131
      %p133 = scmp.ne.s32.totalorder %s119, %s120
      %p134 = scmp.eq.s32.totalorder %s23, 1
      %p135 = por %p133, %p134
      %p137 = scmp.ne.s32.totalorder %s120, %s136
      %p138 = scmp.eq.s32.totalorder %s23, 0
      %p139 = por %p137, %p138
      %p140 = scmp.le.s32.totalorder 1, %s17
      %p141 = scmp.lt.s32.totalorder %s17, 3
      %p142 = pnand %p140, %p141
      %p143 = pneg %p142
      // Predicated region
      $region9: #{tpu_custom_call.1} parent=5 // pred_check
        _
      $region10: #{tpu_custom_call.1} parent=5 // pred_check_branch
        %145 = sbr.rel (%p142) target = $region12
      $region11: #{tpu_custom_call.1} parent=5 // pred_region
        %s146 = ssub.s32 %s17, 1
      $region12: #{tpu_custom_call.1} parent=5 // pred_fallthru
        _
      %p147 = scmp.lt.s32.totalorder %s17, 2
      // Predicated region
      $region13: #{tpu_custom_call.1} parent=5 // pred_check
        %p148 = pneg %p147
      $region14: #{tpu_custom_call.1} parent=5 // pred_check_branch
        %150 = sbr.rel (%p148) target = $region16
      $region15: #{tpu_custom_call.1} parent=5 // pred_region
        // Predicated region
        $region17: #{tpu_custom_call.1} parent=15 // pred_check
          %p151 = pneg %p64
        $region18: #{tpu_custom_call.1} parent=15 // pred_check_branch
          %153 = sbr.rel (%p151) target = $region20
        $region19: #{tpu_custom_call.1} parent=15 // pred_region
          %s154 = sand.u32 %s54, 1
          %s155 = scalar_lea.sflag [#allocation3], %s154
          %s156 = sand.u32 %s54, 1
          %s157 = smul.addr %s156, 8
          %s158 = scalar_lea.vmem [#allocation2], %s157
          %s159 = sadd.s32 %s24, %s26
          %p160 = scmp.lt.s32.totalorder %s159, 0
          %s161 = scalar_select %p160, %s159, 0
          %s162 = smul.u32 2, %s161
          %164 = vsyncadd %s155, 0
          %s165 = smul.addr %s25, 2
          %s166 = sadd.s32 %s162, %s165
          %s167 = smul.addr %s166, 4
          %s168 = scalar_lea.hbm %s0, %s167
          %s170 = sshll.u32 %s168, 4
          %s171 = int_to_ptr.hbm [resolvable:$true] %s170
          %s172 = sshll.u32 %s158, 4
          %s173 = int_to_ptr.vmem [resolvable:$true] %s172
          %175 = dma.hbm_to_vmem [thread:$0]  %s171, 128, %s173, %s155
        $region20: #{tpu_custom_call.1} parent=15 // pred_fallthru
          _
        // Predicated region
        $region21: #{tpu_custom_call.1} parent=15 // pred_check
          %p176 = pneg %p98
        $region22: #{tpu_custom_call.1} parent=15 // pred_check_branch
          %178 = sbr.rel (%p176) target = $region24
        $region23: #{tpu_custom_call.1} parent=15 // pred_region
          %s179 = sand.u32 %s88, 1
          %s180 = scalar_lea.sflag [#allocation6], %s179
          %s181 = sand.u32 %s88, 1
          %s182 = smul.addr %s181, 2
          %s183 = scalar_lea.vmem [#allocation5], %s182
          %s184 = sadd.s32 %s24, %s26
          %p185 = scmp.lt.s32.totalorder %s184, 0
          %s186 = scalar_select %p185, %s184, 0
          %s187 = smul.u32 2, %s186
          %189 = vsyncadd %s180, 0
          %s190 = smul.addr %s25, 2
          %s191 = sadd.s32 %s187, %s190
          %s192 = scalar_lea.hbm %s1, %s191
          %s194 = sshll.u32 %s192, 4
          %s195 = int_to_ptr.hbm [resolvable:$true] %s194
          %s196 = sshll.u32 %s183, 4
          %s197 = int_to_ptr.vmem [resolvable:$true] %s196
          %199 = dma.hbm_to_vmem [thread:$0]  %s195, 32, %s197, %s180
        $region24: #{tpu_custom_call.1} parent=15 // pred_fallthru
          _
      $region16: #{tpu_custom_call.1} parent=5 // pred_fallthru
        _
      %p200 = scmp.le.s32.totalorder 1, %s17
      %p201 = scmp.lt.s32.totalorder %s17, 3
      %p202 = pnand %p200, %p201
      %p203 = pneg %p202
      // Predicated region
      $region25: #{tpu_custom_call.1} parent=5 // pred_check
        _
      $region26: #{tpu_custom_call.1} parent=5 // pred_check_branch
        %205 = sbr.rel (%p202) target = $region28
      $region27: #{tpu_custom_call.1} parent=5 // pred_region
        %s206 = ssub.s32 %s17, 1
        %s207 = sand.u32 %s57, 1
        %s208 = scalar_lea.sflag [#allocation3], %s207
        %s209 = sand.u32 %s57, 1
        %s210 = smul.addr %s209, 8
        %s211 = scalar_lea.vmem [#allocation2], %s210
        // Predicated region
        $region29: #{tpu_custom_call.1} parent=27 // pred_check
          %p212 = pneg %p70
        $region30: #{tpu_custom_call.1} parent=27 // pred_check_branch
          %214 = sbr.rel (%p212) target = $region32
        $region31: #{tpu_custom_call.1} parent=27 // pred_region
          %216 = dma.done %s208, 128
        $region32: #{tpu_custom_call.1} parent=27 // pred_fallthru
          _
        %s217 = sand.u32 %s91, 1
        %s218 = scalar_lea.sflag [#allocation6], %s217
        %s219 = sand.u32 %s91, 1
        %s220 = smul.addr %s219, 2
        %s221 = scalar_lea.vmem [#allocation5], %s220
        // Predicated region
        $region33: #{tpu_custom_call.1} parent=27 // pred_check
          %p222 = pneg %p104
        $region34: #{tpu_custom_call.1} parent=27 // pred_check_branch
          %224 = sbr.rel (%p222) target = $region36
        $region35: #{tpu_custom_call.1} parent=27 // pred_region
          %226 = dma.done %s218, 32
        $region36: #{tpu_custom_call.1} parent=27 // pred_fallthru
          _
        %s227 = sand.u32 %s57, 1
        %s228 = scalar_lea.sflag [#allocation3], %s227
        %s229 = sand.u32 %s57, 1
        %s230 = smul.addr %s229, 8
        %s231 = scalar_lea.vmem [#allocation2], %s230
        %p232 = pneg %p70
        %p233 = pneg %p67
        %s234 = sand.u32 %s91, 1
        %s235 = scalar_lea.sflag [#allocation6], %s234
        %s236 = sand.u32 %s91, 1
        %s237 = smul.addr %s236, 2
        %s238 = scalar_lea.vmem [#allocation5], %s237
        %p239 = pneg %p104
        %p240 = pneg %p101
        %p241 = pneg %p132
        %p242 = pneg %p129
        %s243 = sand.u32 %s119, 1
        %s244 = scalar_lea.sflag [#allocation4], %s243
        %s245 = sand.u32 %s119, 1
        %s246 = smul.addr %s245, 2
        %s247 = scalar_lea.vmem [#allocation7], %s246
        %s248 = sadd.s32 %s27, %s29
        %p249 = scmp.lt.s32.totalorder %s248, 0
        %s250 = scalar_select %p249, %s248, 0
        %s251 = smul.u32 2, %s250
        %s252 = sadd.s32 %s27, %s29
        %p253 = scmp.lt.s32.totalorder %s252, 0
        %s254 = scalar_select %p253, %s252, 0
        %s255 = smul.u32 2, %s254
        %p256 = scmp.eq.s32.totalorder %s29, 0
        // Predicated region
        $region37: #{tpu_custom_call.1} parent=27 // pred_check
          %p257 = pneg %p256
        $region38: #{tpu_custom_call.1} parent=27 // pred_check_branch
          %259 = sbr.rel (%p257) target = $region40
        $region39: #{tpu_custom_call.1} parent=27 // pred_region
          %v260 = vlaneseq
          %vm261 = vcmp.ge.s32.totalorder %v260, 0
          %vm262 = vcmp.lt.s32.totalorder %v260, 256
          %vm263 = vmand %vm261, %vm262
          %264 = vst.msk [vmem:[%s247] sm:$0x3] %vm263, 0.0
        $region40: #{tpu_custom_call.1} parent=27 // pred_fallthru
          _
        %v265 = vld [vmem:[%s211] sm:$0xff]
        %v266 = vld [vmem:[%s221] sm:$0x3]
        %268 = vst [vmem:[#allocation1] ss:$2 sm:$0xff] %v265
        %v269 = vld.sshfl [vmem:[#allocation1] sm:$0xff pattern:$0x75316420]
        %v270 = vld.sshfl [vmem:[#allocation1 + $0x8] sm:$0xff pattern:$0x75316420]
        %vm273 = vcmask 1043456
        %v274 = vsel %vm273, %v269, -inf
        %v275 = vrot.slane %v274, 4
        %v276 = vmax.f32 %v274, %v275
        %v277 = vrot.slane %v276, 2
        %v278 = vmax.f32 %v276, %v277
        %v279 = vrot.slane %v278, 1
        %v280 = vmax.f32 %v278, %v279
        %v281 = vsel %vm273, %v270, -inf
        %v282 = vrot.slane %v281, 4
        %v283 = vmax.f32 %v281, %v282
        %v284 = vrot.slane %v283, 2
        %v285 = vmax.f32 %v283, %v284
        %v286 = vrot.slane %v285, 1
        %v287 = vmax.f32 %v285, %v286
        %v290 = vrot.slane %v287, 4
        %v291 = vsel %vm273, %v280, %v290
        %v293 = vsub.f32 %v265, %v291
        %v294 = vmul.f32 %v293, 1.442695
        %v295 = vpow.pop %v294
        %297 = vst [vmem:[#allocation1] ss:$2 sm:$0xff] %v295
        %v298 = vld.sshfl [vmem:[#allocation1] sm:$0xff pattern:$0x75316420]
        %v299 = vld.sshfl [vmem:[#allocation1 + $0x8] sm:$0xff pattern:$0x75316420]
        %v302 = vsel %vm273, %v298, 0.0
        %v303 = vrot.slane %v302, 4
        %v304 = vadd.f32 %v302, %v303
        %v305 = vrot.slane %v304, 2
        %v306 = vadd.f32 %v304, %v305
        %v307 = vrot.slane %v306, 1
        %v308 = vadd.f32 %v306, %v307
        %v309 = vsel %vm273, %v299, 0.0
        %v310 = vrot.slane %v309, 4
        %v311 = vadd.f32 %v309, %v310
        %v312 = vrot.slane %v311, 2
        %v313 = vadd.f32 %v311, %v312
        %v314 = vrot.slane %v313, 1
        %v315 = vadd.f32 %v313, %v314
        %v316 = vlaneseq
        %v317 = vshrl.u32 %v316, 7
        %v318 = vperm.slane %v266, 0
        %v319 = vperm.slane %v266, 1
        %vm320 = vcmp.eq.s32.totalorder %v317, %v318
        %vm321 = vcmp.eq.s32.totalorder %v317, %v319
        %323 = vst [vmem:[#allocation1] ss:$2 sm:$0xff] %v293
        %v324 = vld.sshfl [vmem:[#allocation1] sm:$0xff pattern:$0x75316420]
        %v325 = vld.sshfl [vmem:[#allocation1 + $0x8] sm:$0xff pattern:$0x75316420]
        %v328 = vsel %vm320, %v324, 0.0
        %v329 = vsel %vm321, %v325, 0.0
        %v330 = vsel %vm273, %v328, 0.0
        %v331 = vrot.slane %v330, 4
        %v332 = vadd.f32 %v330, %v331
        %v333 = vrot.slane %v332, 2
        %v334 = vadd.f32 %v332, %v333
        %v335 = vrot.slane %v334, 1
        %v336 = vadd.f32 %v334, %v335
        %v337 = vsel %vm273, %v329, 0.0
        %v338 = vrot.slane %v337, 4
        %v339 = vadd.f32 %v337, %v338
        %v340 = vrot.slane %v339, 2
        %v341 = vadd.f32 %v339, %v340
        %v342 = vrot.slane %v341, 1
        %v343 = vadd.f32 %v341, %v342
        %v344 = vlog2.pop %v308
        %v345 = vmul.f32 %v344, 0.6931472
        %v346 = vlog2.pop %v315
        %v347 = vmul.f32 %v346, 0.6931472
        %v348 = vsub.f32 %v336, %v345
        %v349 = vsub.f32 %v343, %v347
        %v350 = vmul.f32 %v348, 1.442695
        %v351 = vpow.pop %v350
        %v352 = vmul.f32 %v349, 1.442695
        %v353 = vpow.pop %v352
        %v354 = vsub.f32 1.0, %v351
        %v355 = vsub.f32 1.0, %v353
        %v356 = vmul.f32 %v354, %v354
        %v357 = vmul.f32 %v355, %v355
        %vm358 = vcmp.ne.s32.totalorder %v266, 255
        %v359 = vmul.f32 %v356, %v348
        %v360 = vmul.f32 %v357, %v349
        %v361 = vsub.f32 0.0, %v359
        %v362 = vsub.f32 0.0, %v360
        %v365 = vrot.slane %v362, 7
        %vm366 = vcmask 1040384
        %v367 = vsel %vm366, %v361, %v365
        %v369 = vsel %vm358, %v367, 0.0
        %v370 = vld [vmem:[%s247] sm:$0x3]
        %v371 = vadd.f32 %v370, %v369
        %v372 = vlaneseq
        %vm373 = vcmp.ge.s32.totalorder %v372, 0
        %vm374 = vcmp.lt.s32.totalorder %v372, 256
        %vm375 = vmand %vm373, %vm374
        %376 = vst.msk [vmem:[%s247] sm:$0x3] %vm375, %v371
        %s377 = sand.u32 %s119, 1
        %s378 = scalar_lea.sflag [#allocation4], %s377
        %s379 = sand.u32 %s119, 1
        %s380 = smul.addr %s379, 2
        %s381 = scalar_lea.vmem [#allocation7], %s380
        // Predicated region
        $region41: #{tpu_custom_call.1} parent=27 // pred_check
          %p382 = pneg %p129
        $region42: #{tpu_custom_call.1} parent=27 // pred_check_branch
          %384 = sbr.rel (%p382) target = $region44
        $region43: #{tpu_custom_call.1} parent=27 // pred_region
          %386 = vsyncadd %s378, 0
          %s387 = smul.addr %s27, 2
          %s388 = smul.addr %s28, 2
          %s389 = sadd.s32 %s387, %s388
          %s390 = scalar_lea.hbm %s2, %s389
          %s392 = sshll.u32 %s381, 4
          %s393 = int_to_ptr.vmem [resolvable:$true] %s392
          %s394 = sshll.u32 %s390, 4
          %s395 = int_to_ptr.hbm [resolvable:$true] %s394
          %397 = dma.vmem_to_hbm [thread:$0]  %s393, 32, %s395, %s378
        $region44: #{tpu_custom_call.1} parent=27 // pred_fallthru
          _
      $region28: #{tpu_custom_call.1} parent=5 // pred_fallthru
        _
      %p398 = scmp.le.s32.totalorder 2, %s17
      // Predicated region
      $region45: #{tpu_custom_call.1} parent=5 // pred_check
        %p399 = pneg %p398
      $region46: #{tpu_custom_call.1} parent=5 // pred_check_branch
        %401 = sbr.rel (%p399) target = $region48
      $region47: #{tpu_custom_call.1} parent=5 // pred_region
        %s402 = ssub.s32 %s17, 2
        // Predicated region
        $region49: #{tpu_custom_call.1} parent=47 // pred_check
          %p403 = pneg %p135
        $region50: #{tpu_custom_call.1} parent=47 // pred_check_branch
          %405 = sbr.rel (%p403) target = $region52
        $region51: #{tpu_custom_call.1} parent=47 // pred_region
          %s406 = sand.u32 %s120, 1
          %s407 = scalar_lea.sflag [#allocation4], %s406
          %s408 = sand.u32 %s120, 1
          %s409 = smul.addr %s408, 2
          %s410 = scalar_lea.vmem [#allocation7], %s409
          %412 = dma.done %s407, 32
        $region52: #{tpu_custom_call.1} parent=47 // pred_fallthru
          _
      $region48: #{tpu_custom_call.1} parent=5 // pred_fallthru
        _
    $region6: #{tpu_custom_call.1} parent=1 // loop_footer
      %s21 = sadd.s32 1, %s17
    $region7: #{tpu_custom_call.1} parent=1 // loop_footer_branch
      %16 = sbr.rel target = $region3
    $region8: #{tpu_custom_call.1} parent=1 // loop_exit
      _
    %413 = vsyncpa [#allocation3], 1
    %s414 = scalar_lea.sflag [#allocation3], 1
    %415 = vsyncpa %s414, 1
    %416 = vsyncpa [#allocation6], 1
    %s417 = scalar_lea.sflag [#allocation6], 1
    %418 = vsyncpa %s417, 1
    %419 = vsyncpa [#allocation4], 1
    %s420 = scalar_lea.sflag [#allocation4], 1
    %421 = vsyncpa %s420, 1

</llo_original>
